<compile_context>
chip_gen: v6e
topology: v6e:2x2x1
jax: 0.10.0
libtpu: 0.0.40
codegen_flags: <defaults>
</compile_context>

<pallas_src>
import functools

import jax
import jax.numpy as jnp
from jax import lax
from jax.experimental import pallas as pl
from jax.experimental.pallas import tpu as pltpu

PLU_ALPHA = 0.1
PLU_C = 1.0
OPAD = 128          # lane-dense width of the fused kernel's main output slab


def _plu(x):
    return jnp.maximum(PLU_ALPHA * (x + PLU_C) - PLU_C,
                       jnp.minimum(PLU_ALPHA * (x - PLU_C) + PLU_C, x))


def _run_mlp(x, layers, activation_at_last):
    """layers: list of (w_ref, b_ref); PLU between layers (+ optionally after last)."""
    n = len(layers)
    for l, (w_ref, b_ref) in enumerate(layers):
        x = jnp.dot(x, w_ref[...], preferred_element_type=jnp.float32) + b_ref[...]
        if l < n - 1 or activation_at_last:
            x = _plu(x)
    return x


# ----------------------------------------------------------------------------
# Fused MLP kernel (used once per set_target for the target encoder)
# ----------------------------------------------------------------------------

def _mlp_kernel(*refs, n_layers, activation_at_last):
    x_ref, rest = refs[0], refs[1:]
    out_ref = rest[-1]
    layers = [(rest[2 * l], rest[2 * l + 1]) for l in range(n_layers)]
    out_ref[...] = _run_mlp(x_ref[...], layers, activation_at_last).astype(out_ref.dtype)


def mlp_apply(params, x, activation_at_last):
    """Whole MLP in a single pallas_call (all layers fused, VMEM resident)."""
    n_layers = len(params)
    B = x.shape[0]
    d_out = params[-1][0].shape[1]
    flat = []
    for w, b in params:
        flat += [w, b]
    vmem = pl.BlockSpec(memory_space=pltpu.MemorySpace.VMEM)
    return pl.pallas_call(
        functools.partial(_mlp_kernel, n_layers=n_layers,
                          activation_at_last=activation_at_last),
        out_shape=jax.ShapeDtypeStruct((B, d_out), jnp.float32),
        in_specs=[vmem] * (1 + len(flat)),
        out_specs=vmem,
    )(x, *flat)


# ----------------------------------------------------------------------------
# Fused Generator forward-step kernel
# ----------------------------------------------------------------------------

def _generator_step_kernel(*refs, n_se, n_oe, n_dec, n_lq, n_rp, n_ct):
    it = iter(refs)

    def take(k):
        return tuple(next(it) for _ in range(k))

    (state_in_ref, offset_in_ref, h_tgt_ref, z_off_ref, z_tgt_ref,
     tta_ref, res_ref, h_prev_ref, c_prev_ref, zscale_ref) = take(10)
    se_layers = [take(2) for _ in range(n_se)]
    oe_layers = [take(2) for _ in range(n_oe)]
    gate_w = [take(5) for _ in range(4)]          # (Ws, Wo, Wt, Wh, b) per gate i,f,g,o
    dec_layers = [take(2) for _ in range(n_dec)]
    o_main_ref, h_out_ref, c_out_ref = take(3)

    # --- encoders (PLU after every layer incl. last) -------------------------
    h_state = _run_mlp(state_in_ref[...], se_layers, activation_at_last=True)
    h_off = _run_mlp(offset_in_ref[...], oe_layers, activation_at_last=True)
    h_tgt = h_tgt_ref[...]

    # --- time-to-arrival embedding + latent noise ----------------------------
    # reference: x + tta_embedding(x, tta) == 2*x + emb_row
    tta_row = tta_ref[...]                 # (1, OUT) -> broadcasts over batch
    zs = zscale_ref[0]                     # SMEM scalar (z schedule from tta)
    a_state = 2.0 * h_state + tta_row
    a_off = 2.0 * h_off + tta_row + zs * z_off_ref[...]
    a_tgt = 2.0 * h_tgt + tta_row + zs * z_tgt_ref[...]

    # --- single-step LSTM cell (gate weights pre-split: no lane slicing) -----
    h_prev = h_prev_ref[...]
    c_prev = c_prev_ref[...]

    def gate_pre(ws, wo, wt, wh, b):
        return (jnp.dot(a_state, ws[...], preferred_element_type=jnp.float32)
                + jnp.dot(a_off, wo[...], preferred_element_type=jnp.float32)
                + jnp.dot(a_tgt, wt[...], preferred_element_type=jnp.float32)
                + jnp.dot(h_prev, wh[...], preferred_element_type=jnp.float32)
                + b[...])

    i_g = jax.nn.sigmoid(gate_pre(*gate_w[0]))
    f_g = jax.nn.sigmoid(gate_pre(*gate_w[1]))
    g_g = jnp.tanh(gate_pre(*gate_w[2]))
    o_g = jax.nn.sigmoid(gate_pre(*gate_w[3]))
    c_new = f_g * c_prev + i_g * g_g
    h_new = o_g * jnp.tanh(c_new)

    # --- decoder (last layer zero-padded to OPAD lanes -> lane-dense store) --
    y = _run_mlp(h_new, dec_layers, activation_at_last=False)      # (B, OPAD)

    # residual add on [local_Q | root_p] lanes, sigmoid on the contact lanes
    col = lax.broadcasted_iota(jnp.int32, y.shape, 1)
    lo = n_lq + n_rp
    contact_mask = jnp.logical_and(col >= lo, col < lo + n_ct)
    o_main_ref[...] = jnp.where(contact_mask, jax.nn.sigmoid(y),
                                y + res_ref[...]).astype(o_main_ref.dtype)
    h_out_ref[...] = h_new.astype(h_out_ref.dtype)
    c_out_ref[...] = c_new.astype(c_out_ref.dtype)


def _forward_step(params, h_prev, c_prev, h_target, local_Q_target, root_p_target,
                  local_Q, root_v, root_p, contacts, tta, key):
    B, n_lq = local_Q.shape
    n_rp = root_p.shape[1]
    n_ct = contacts.shape[1]
    OUT = h_target.shape[1]
    H = h_prev.shape[1]

    se = params['state_encoder']
    oe = params['offset_encoder']
    dec = params['decoder']
    lstm_gates = params['lstm_gates']
    tta_table = params['tta_table']
    max_len = tta_table.shape[0]

    # encoder inputs (tiny concats, fused by XLA)
    state_in = jnp.concatenate([contacts, local_Q, root_v], axis=-1)
    offset_in = jnp.concatenate([root_p_target - root_p,
                                 local_Q_target - local_Q], axis=-1)

    # TimeToArrival: row = embedding[min(tta, max_len - 1) - 1] (negative wraps)
    tta_i = tta.astype(jnp.int32)
    row_idx = (jnp.minimum(tta_i, max_len - 1) - 1) % max_len
    tta_row = lax.dynamic_slice_in_dim(tta_table, row_idx, 1, axis=0)   # (1, OUT)

    # sample_z_target: N(0, 0.5) scaled by tta schedule (scale applied in-kernel)
    tta_f = tta_i.astype(jnp.float32)
    zscale = jnp.where(tta_i >= 60, 1.0,
                       jnp.where(tta_i >= 10, (tta_f - 10.0) / 50.0, 0.0))
    zscale = zscale.astype(jnp.float32).reshape(1)
    z = 0.5 * jax.random.normal(key, (B, 2 * OUT), jnp.float32)
    z_off, z_tgt = z[:, :OUT], z[:, OUT:]

    # residual slab aligned with the decoder's padded output lanes
    res = jnp.zeros((B, OPAD), jnp.float32)
    res = res.at[:, :n_lq].set(local_Q)
    res = res.at[:, n_lq:n_lq + n_rp].set(root_p)

    flat_w = []
    for w, b in se:
        flat_w += [w, b]
    for w, b in oe:
        flat_w += [w, b]
    for gset in lstm_gates:
        flat_w += list(gset)
    for w, b in dec:
        flat_w += [w, b]

    kernel_inputs = [state_in, offset_in, h_target, z_off, z_tgt, tta_row, res,
                     h_prev, c_prev, zscale] + flat_w

    vmem = pl.BlockSpec(memory_space=pltpu.MemorySpace.VMEM)
    smem = pl.BlockSpec(memory_space=pltpu.MemorySpace.SMEM)
    in_specs = [vmem] * 9 + [smem] + [vmem] * len(flat_w)

    def _mlp_flops(layers):
        return sum(2 * B * int(w.shape[0]) * int(w.shape[1]) for w, _ in layers)

    flops = (_mlp_flops(se) + _mlp_flops(oe) + _mlp_flops(dec)
             + sum(2 * B * int(w.shape[0]) * int(w.shape[1])
                   for gset in lstm_gates for w in gset[:4]))
    bytes_accessed = 4 * (sum(int(a.size) for a in kernel_inputs) + B * (OPAD + 2 * H))

    o_main, h_new, c_new = pl.pallas_call(
        functools.partial(_generator_step_kernel,
                          n_se=len(se), n_oe=len(oe), n_dec=len(dec),
                          n_lq=n_lq, n_rp=n_rp, n_ct=n_ct),
        out_shape=(jax.ShapeDtypeStruct((B, OPAD), jnp.float32),
                   jax.ShapeDtypeStruct((B, H), jnp.float32),
                   jax.ShapeDtypeStruct((B, H), jnp.float32)),
        in_specs=in_specs,
        out_specs=(vmem, vmem, vmem),
        input_output_aliases={7: 1, 8: 2},      # h, c updated in place
        cost_estimate=pl.CostEstimate(flops=int(flops),
                                      transcendentals=int(B * (5 * H + OPAD)),
                                      bytes_accessed=int(bytes_accessed)),
    )(*kernel_inputs)

    lq_out = o_main[:, :n_lq]
    rp_out = o_main[:, n_lq:n_lq + n_rp]
    c_out = o_main[:, n_lq + n_rp:n_lq + n_rp + n_ct]
    return (lq_out, rp_out, c_out), (h_new, c_new)


# ----------------------------------------------------------------------------
# Parameter construction (deterministic, PyTorch-style init)
# ----------------------------------------------------------------------------

def make_linear_params(key, d_in, d_out):
    k1, k2 = jax.random.split(key)
    bound = 1.0 / (d_in ** 0.5)
    w = jax.random.uniform(k1, (d_in, d_out), jnp.float32, -bound, bound)
    b = jax.random.uniform(k2, (1, d_out), jnp.float32, -bound, bound)
    return w, b


def make_mlp_params(key, d_in, hidden_dims, d_out):
    dims = [d_in] + list(hidden_dims) + [d_out]
    keys = jax.random.split(key, len(dims) - 1)
    return [make_linear_params(k, a, b) for k, a, b in zip(keys, dims[:-1], dims[1:])]


def make_tta_embedding(dim, max_len):
    pos = jnp.arange(max_len, dtype=jnp.float32)[:, None]
    div_term = 1.0 / jnp.power(10000.0, jnp.arange(0, dim, 2, dtype=jnp.float32) / dim)
    ang = pos * div_term
    emb = jnp.zeros((max_len, dim), jnp.float32)
    emb = emb.at[:, 0::2].set(jnp.sin(ang))
    emb = emb.at[:, 1::2].set(jnp.cos(ang))
    emb = emb.at[-5:].set(emb[-5])      # embedding[-5:] = embedding[-5]
    return emb


# ----------------------------------------------------------------------------
# Generator (JAX/Pallas)
# ----------------------------------------------------------------------------

class GeneratorPallas:
    def __init__(self, key, dof, input_dims, hidden_dims, output_dim, tta_max_len=40):
        assert dof <= OPAD and output_dim % 2 == 0
        ks = jax.random.split(key, 5)
        self.output_dim = output_dim
        self.hidden_dims = hidden_dims

        state_enc = make_mlp_params(ks[0], input_dims['state_encoder'],
                                    hidden_dims['state_encoder'], output_dim)
        offset_enc = make_mlp_params(ks[1], input_dims['offset_encoder'],
                                     hidden_dims['offset_encoder'], output_dim)
        self.target_encoder = make_mlp_params(ks[2], input_dims['target_encoder'],
                                              hidden_dims['target_encoder'], output_dim)
        decoder = make_mlp_params(ks[3], hidden_dims['lstm'],
                                  hidden_dims['decoder'], dof)
        # zero-pad the last decoder layer to OPAD output lanes (lane-dense store)
        w_last, b_last = decoder[-1]
        w_pad = jnp.zeros((w_last.shape[0], OPAD), jnp.float32).at[:, :dof].set(w_last)
        b_pad = jnp.zeros((1, OPAD), jnp.float32).at[:, :dof].set(b_last)
        decoder[-1] = (w_pad, b_pad)

        # LSTM parameters (PyTorch layout / init), pre-split per gate (i,f,g,o)
        # and per source (state / offset / target / hidden) so the kernel never
        # slices the lane axis at 32-lane boundaries.
        H = hidden_dims['lstm']
        D = output_dim
        lk = jax.random.split(ks[4], 4)
        bound = 1.0 / (H ** 0.5)
        w_ih = jax.random.uniform(lk[0], (3 * D, 4 * H), jnp.float32, -bound, bound)
        w_hh = jax.random.uniform(lk[1], (H, 4 * H), jnp.float32, -bound, bound)
        b_ih = jax.random.uniform(lk[2], (1, 4 * H), jnp.float32, -bound, bound)
        b_hh = jax.random.uniform(lk[3], (1, 4 * H), jnp.float32, -bound, bound)
        lstm_gates = []
        for g in range(4):
            sl = slice(g * H, (g + 1) * H)
            lstm_gates.append((w_ih[0:D, sl],          # state-encoder rows
                               w_ih[D:2 * D, sl],      # offset-encoder rows
                               w_ih[2 * D:3 * D, sl],  # target-encoder rows
                               w_hh[:, sl],
                               b_ih[:, sl] + b_hh[:, sl]))

        self.params = {
            'state_encoder': state_enc,
            'offset_encoder': offset_enc,
            'decoder': decoder,
            'lstm_gates': lstm_gates,
            'tta_table': make_tta_embedding(output_dim, tta_max_len),
        }
        self._step = jax.jit(_forward_step)

    def init_hidden(self, batch_size):
        H = self.hidden_dims['lstm']
        self.h = jnp.zeros((batch_size, H), jnp.float32)
        self.c = jnp.zeros((batch_size, H), jnp.float32)

    def set_target(self, Q_target, root_p_target):
        self.local_Q_target = Q_target
        self.root_p_target = root_p_target
        self.h_target = mlp_apply(self.target_encoder, Q_target, activation_at_last=True)

    def forward(self, x, tta, z_key):
        local_Q, root_v, root_p, contacts = x
        outs, (self.h, self.c) = self._step(
            self.params, self.h, self.c, self.h_target,
            self.local_Q_target, self.root_p_target,
            local_Q, root_v, root_p, contacts,
            jnp.asarray(tta, jnp.int32), z_key)
        return outs


# ----------------------------------------------------------------------------
# Demo
# ----------------------------------------------------------------------------

if __name__ == "__main__":
    B = 2
    LQ, RV, RP, CT = 16, 3, 3, 4            # feature dims
    DOF = LQ + RV + CT                       # decoder output = 23
    OUT = 32                                 # encoder output dim (even, for tta table)
    hidden_dims = {'state_encoder': [32], 'offset_encoder': [32],
                   'target_encoder': [32], 'lstm': 32, 'decoder': [32, 32]}
    input_dims = {'state_encoder': CT + LQ + RV,
                  'offset_encoder': RP + LQ,
                  'target_encoder': LQ}

    root_key = jax.random.PRNGKey(0)
    kp, kx, kz1, kz2 = jax.random.split(root_key, 4)
    gen = GeneratorPallas(kp, DOF, input_dims, hidden_dims, OUT)

    kq, kv, kpp, kc, kqt, kpt = jax.random.split(kx, 6)
    local_Q = jax.random.normal(kq, (B, LQ), jnp.float32)
    root_v = jax.random.normal(kv, (B, RV), jnp.float32)
    root_p = jax.random.normal(kpp, (B, RP), jnp.float32)
    contacts = jax.random.normal(kc, (B, CT), jnp.float32)
    Q_target = jax.random.normal(kqt, (B, LQ), jnp.float32)
    root_p_target = jax.random.normal(kpt, (B, RP), jnp.float32)

    gen.init_hidden(B)
    gen.set_target(Q_target, root_p_target)

    lq_out, rp_out, c_out = gen.forward((local_Q, root_v, root_p, contacts), 20, kz1)
    # second autoregressive step (h/c carried through the aliased state outputs)
    lq_out2, rp_out2, c_out2 = gen.forward((lq_out, root_v, rp_out, c_out), 19, kz2)

    jax.block_until_ready((lq_out, rp_out, c_out, lq_out2, rp_out2, c_out2, gen.h, gen.c))
    assert lq_out.shape == (B, LQ) and lq_out2.shape == (B, LQ)
    assert rp_out.shape == (B, RP) and rp_out2.shape == (B, RP)
    assert c_out.shape == (B, CT) and c_out2.shape == (B, CT)
    assert bool(jnp.all(jnp.isfinite(lq_out2)))
    print("KERNEL_OK")
</pallas_src>

<mosaic_0001>
module attributes {stable_mosaic.version = 11 : i64} {
  func.func @_mlp_kernel(%arg0: memref<2x16xf32, #tpu.memory_space<vmem>>, %arg1: memref<16x32xf32, #tpu.memory_space<vmem>>, %arg2: memref<1x32xf32, #tpu.memory_space<vmem>>, %arg3: memref<32x32xf32, #tpu.memory_space<vmem>>, %arg4: memref<1x32xf32, #tpu.memory_space<vmem>>, %arg5: memref<2x32xf32, #tpu.memory_space<vmem>>) attributes {dimension_semantics = [], scalar_prefetch = 0 : i64, scratch_operands = 0 : i64, tpu.core_type = #tpu.core_type<tc>} {
    %c0 = arith.constant 0 : index
    %c0_0 = arith.constant 0 : index
    %0 = vector.load %arg0[%c0, %c0_0] : memref<2x16xf32, #tpu.memory_space<vmem>>, vector<2x16xf32>
    %c0_1 = arith.constant 0 : index
    %c0_2 = arith.constant 0 : index
    %1 = vector.load %arg1[%c0_1, %c0_2] : memref<16x32xf32, #tpu.memory_space<vmem>>, vector<16x32xf32>
    %cst = arith.constant dense<0.000000e+00> : vector<2x32xf32>
    %2 = tpu.matmul %0, %1, %cst {dimension_numbers = #tpu.dot_dimension_numbers<[1], [0], [0], [1], [0, 0, 1, 1], [], []>} : vector<2x16xf32>, vector<16x32xf32>, vector<2x32xf32> -> vector<2x32xf32>
    %c0_3 = arith.constant 0 : index
    %c0_4 = arith.constant 0 : index
    %3 = vector.load %arg2[%c0_3, %c0_4] : memref<1x32xf32, #tpu.memory_space<vmem>>, vector<1x32xf32>
    %4 = vector.broadcast %3 : vector<1x32xf32> to vector<2x32xf32>
    %5 = arith.addf %2, %4 : vector<2x32xf32>
    %cst_5 = arith.constant 1.000000e+00 : f32
    %6 = vector.broadcast %cst_5 : f32 to vector<2x32xf32>
    %7 = arith.addf %5, %6 : vector<2x32xf32>
    %cst_6 = arith.constant 1.000000e-01 : f32
    %8 = vector.broadcast %cst_6 : f32 to vector<2x32xf32>
    %9 = arith.mulf %8, %7 : vector<2x32xf32>
    %cst_7 = arith.constant 1.000000e+00 : f32
    %10 = vector.broadcast %cst_7 : f32 to vector<2x32xf32>
    %11 = arith.subf %9, %10 : vector<2x32xf32>
    %cst_8 = arith.constant 1.000000e+00 : f32
    %12 = vector.broadcast %cst_8 : f32 to vector<2x32xf32>
    %13 = arith.subf %5, %12 : vector<2x32xf32>
    %cst_9 = arith.constant 1.000000e-01 : f32
    %14 = vector.broadcast %cst_9 : f32 to vector<2x32xf32>
    %15 = arith.mulf %14, %13 : vector<2x32xf32>
    %cst_10 = arith.constant 1.000000e+00 : f32
    %16 = vector.broadcast %cst_10 : f32 to vector<2x32xf32>
    %17 = arith.addf %15, %16 : vector<2x32xf32>
    %18 = arith.minimumf %17, %5 : vector<2x32xf32>
    %19 = arith.maximumf %11, %18 : vector<2x32xf32>
    %c0_11 = arith.constant 0 : index
    %c0_12 = arith.constant 0 : index
    %20 = vector.load %arg3[%c0_11, %c0_12] : memref<32x32xf32, #tpu.memory_space<vmem>>, vector<32x32xf32>
    %cst_13 = arith.constant dense<0.000000e+00> : vector<2x32xf32>
    %21 = tpu.matmul %19, %20, %cst_13 {dimension_numbers = #tpu.dot_dimension_numbers<[1], [0], [0], [1], [0, 0, 1, 1], [], []>} : vector<2x32xf32>, vector<32x32xf32>, vector<2x32xf32> -> vector<2x32xf32>
    %c0_14 = arith.constant 0 : index
    %c0_15 = arith.constant 0 : index
    %22 = vector.load %arg4[%c0_14, %c0_15] : memref<1x32xf32, #tpu.memory_space<vmem>>, vector<1x32xf32>
    %23 = vector.broadcast %22 : vector<1x32xf32> to vector<2x32xf32>
    %24 = arith.addf %21, %23 : vector<2x32xf32>
    %cst_16 = arith.constant 1.000000e+00 : f32
    %25 = vector.broadcast %cst_16 : f32 to vector<2x32xf32>
    %26 = arith.addf %24, %25 : vector<2x32xf32>
    %cst_17 = arith.constant 1.000000e-01 : f32
    %27 = vector.broadcast %cst_17 : f32 to vector<2x32xf32>
    %28 = arith.mulf %27, %26 : vector<2x32xf32>
    %cst_18 = arith.constant 1.000000e+00 : f32
    %29 = vector.broadcast %cst_18 : f32 to vector<2x32xf32>
    %30 = arith.subf %28, %29 : vector<2x32xf32>
    %cst_19 = arith.constant 1.000000e+00 : f32
    %31 = vector.broadcast %cst_19 : f32 to vector<2x32xf32>
    %32 = arith.subf %24, %31 : vector<2x32xf32>
    %cst_20 = arith.constant 1.000000e-01 : f32
    %33 = vector.broadcast %cst_20 : f32 to vector<2x32xf32>
    %34 = arith.mulf %33, %32 : vector<2x32xf32>
    %cst_21 = arith.constant 1.000000e+00 : f32
    %35 = vector.broadcast %cst_21 : f32 to vector<2x32xf32>
    %36 = arith.addf %34, %35 : vector<2x32xf32>
    %37 = arith.minimumf %36, %24 : vector<2x32xf32>
    %38 = arith.maximumf %30, %37 : vector<2x32xf32>
    %c0_22 = arith.constant 0 : index
    %c0_23 = arith.constant 0 : index
    %39 = vector.load %arg5[%c0_22, %c0_23] : memref<2x32xf32, #tpu.memory_space<vmem>>, vector<2x32xf32>
    tpu.vector_store %arg5[%c0_22, %c0_23], %38 {strides = array<i32>} : memref<2x32xf32, #tpu.memory_space<vmem>>, vector<2x32xf32>,
    return
  }
}

</mosaic_0001>

<llo_original>
// kernel: tpu_custom_call.1
$region0: #{tpu_custom_call.1}
  #allocation0 [shape = 'u32[]', space=smem, size = 0x4, offset = 0x4, fixed_abs, tag = 'smem constant byte address 0x4 - core index']
  #allocation1 [shape = 'u32[144,128]{1,0:T(1,128)}', space=vmem, size = 0x12000, scoped, tag = 'internal scratch']
  %s0 = inlined_call_operand.hbm [shape: f32[2,16], index: 0, kind: input, shape index: {}]
  %s1 = inlined_call_operand.hbm [shape: f32[16,32], index: 1, kind: input, shape index: {}]
  %s2 = inlined_call_operand.vmem [shape: f32[1,32], index: 2, kind: input, shape index: {}]
  %s3 = inlined_call_operand.hbm [shape: f32[32,32], index: 3, kind: input, shape index: {}]
  %s4 = inlined_call_operand.vmem [shape: f32[1,32], index: 4, kind: input, shape index: {}]
  %s5 = inlined_call_operand.hbm [shape: f32[2,32], index: 5, kind: output, shape index: {}]
  %s6 = sld [smem:[#allocation0]]
  $region42: #{tpu_custom_call.1} parent=0
    _
  %s8 = ssub.s32 1, %s6
  %s9 = scalar_select 0, %s8, %s6
  $region1: #{tpu_custom_call.1} parent=0
    #allocation2 [shape = 'u8[1024]{0}', space=vmem, size = 0x400, scoped, tag = 'input window, operand 0, single buffered']
    #allocation3 [shape = 's32[1]{0}', space=sflag, size = 0x4, scoped, tag = 'scoped memory for tpu_custom_call.1']
    #allocation4 [shape = 's32[1]{0}', space=sflag, size = 0x4, scoped, tag = 'scoped memory for tpu_custom_call.1']
    #allocation5 [shape = 'u8[8192]{0}', space=vmem, size = 0x2000, scoped, tag = 'input window, operand 1, single buffered']
    #allocation6 [shape = 's32[1]{0}', space=sflag, size = 0x4, scoped, tag = 'scoped memory for tpu_custom_call.1']
    #allocation7 [shape = 'u8[16384]{0}', space=vmem, size = 0x4000, scoped, tag = 'input window, operand 3, single buffered']
    #allocation8 [shape = 'u8[1024]{0}', space=vmem, size = 0x400, scoped, tag = 'output window, operand 0, single buffered']
    %10 = vsyncpa [#allocation3], 0
    %11 = vsyncpa [#allocation6], 0
    %12 = vsyncpa [#allocation4], 0
    // Predicated region
    $region2: #{tpu_custom_call.1} parent=1 // pred_check
      _
    $region3: #{tpu_custom_call.1} parent=1 // pred_check_branch
      %14 = sbr.rel (0) target = $region5
    $region4: #{tpu_custom_call.1} parent=1 // pred_region
      %s16 = ssub.s32 32, 32
      %17 = vsyncadd [#allocation3], %s16
      %s19 = sshll.u32 [#allocation2], 4
      %s20 = int_to_ptr.vmem [resolvable:$true] %s19
      %22 = dma.hbm_to_vmem [thread:$0]  %s0, 32, %s20, [#allocation3]
    $region5: #{tpu_custom_call.1} parent=1 // pred_fallthru
      _
    // Predicated region
    $region6: #{tpu_custom_call.1} parent=1 // pred_check
      _
    $region7: #{tpu_custom_call.1} parent=1 // pred_check_branch
      %24 = sbr.rel (0) target = $region9
    $region8: #{tpu_custom_call.1} parent=1 // pred_region
      %s26 = ssub.s32 256, 256
      %27 = vsyncadd [#allocation6], %s26
      %s28 = sshll.u32 [#allocation5], 4
      %s29 = int_to_ptr.vmem [resolvable:$true] %s28
      %34 = dma.hbm_to_vmem [thread:$0]  %s1, 256, %s29, [#allocation6], 128, 128, 8
    $region9: #{tpu_custom_call.1} parent=1 // pred_fallthru
      _
    // Predicated region
    $region10: #{tpu_custom_call.1} parent=1 // pred_check
      _
    $region11: #{tpu_custom_call.1} parent=1 // pred_check_branch
      %36 = sbr.rel (0) target = $region13
    $region12: #{tpu_custom_call.1} parent=1 // pred_region
      _
    $region13: #{tpu_custom_call.1} parent=1 // pred_fallthru
      _
    // Predicated region
    $region14: #{tpu_custom_call.1} parent=1 // pred_check
      _
    $region15: #{tpu_custom_call.1} parent=1 // pred_check_branch
      %38 = sbr.rel (0) target = $region17
    $region16: #{tpu_custom_call.1} parent=1 // pred_region
      %s40 = ssub.s32 512, 512
      %41 = vsyncadd [#allocation6], %s40
      %s42 = sshll.u32 [#allocation7], 4
      %s43 = int_to_ptr.vmem [resolvable:$true] %s42
      %48 = dma.hbm_to_vmem [thread:$0]  %s3, 512, %s43, [#allocation6], 128, 128, 8
    $region17: #{tpu_custom_call.1} parent=1 // pred_fallthru
      _
    // Predicated region
    $region18: #{tpu_custom_call.1} parent=1 // pred_check
      _
    $region19: #{tpu_custom_call.1} parent=1 // pred_check_branch
      %50 = sbr.rel (0) target = $region21
    $region20: #{tpu_custom_call.1} parent=1 // pred_region
      _
    $region21: #{tpu_custom_call.1} parent=1 // pred_fallthru
      _
    // Predicated region
    $region22: #{tpu_custom_call.1} parent=1 // pred_check
      _
    $region23: #{tpu_custom_call.1} parent=1 // pred_check_branch
      %52 = sbr.rel (0) target = $region25
    $region24: #{tpu_custom_call.1} parent=1 // pred_region
      %53 = dma.done [#allocation3], 32
    $region25: #{tpu_custom_call.1} parent=1 // pred_fallthru
      _
    // Predicated region
    $region26: #{tpu_custom_call.1} parent=1 // pred_check
      _
    $region27: #{tpu_custom_call.1} parent=1 // pred_check_branch
      %55 = sbr.rel (0) target = $region29
    $region28: #{tpu_custom_call.1} parent=1 // pred_region
      %56 = dma.done [#allocation6], 256
    $region29: #{tpu_custom_call.1} parent=1 // pred_fallthru
      _
    // Predicated region
    $region30: #{tpu_custom_call.1} parent=1 // pred_check
      _
    $region31: #{tpu_custom_call.1} parent=1 // pred_check_branch
      %58 = sbr.rel (0) target = $region33
    $region32: #{tpu_custom_call.1} parent=1 // pred_region
      %59 = dma.done [#allocation6], 512
    $region33: #{tpu_custom_call.1} parent=1 // pred_fallthru
      _
    %v60 = vld [vmem:[#allocation2] sm:$0x3]
    %v61 = vld [vmem:[#allocation5] sm:$0xff]
    %v62 = vld [vmem:[#allocation5 + $0x8] sm:$0xff]
    %v63 = vld [vmem:[%s2] sm:$0x1]
    %v65 = vlaneseq
    %v66 = vshrl.u32 %v65, 7
    %v67 = vsub.s32 0, %v66
    %v68 = vrot.slane %v63, %v67
    %vm70 = vcmask 130048
    %v72 = vsel %vm70, %v60, 0
    %74 = vmatprep.subr.mxu0 0.0
    %75 = vmatpush1.msra.mxu0 0.0
    %76 = vmatprep.subr.mxu0 0.0
    %77 = vmatpush1.msra.mxu0 0.0
    %78 = vmatprep.subr.mxu0 0.0
    %79 = vmatpush1.msra.mxu0 0.0
    %80 = vmatprep.subr.mxu0 0.0
    %81 = vmatpush1.msra.mxu0 0.0
    %82 = vmatprep.subr.mxu0 0.0
    %83 = vmatpush1.msra.mxu0 0.0
    %84 = vmatprep.subr.mxu0 0.0
    %85 = vmatpush1.msra.mxu0 0.0
    %86 = vmatprep.subr.mxu0 0.0
    %87 = vmatpush1.msra.mxu0 0.0
    %88 = vmatprep.subr.mxu0 0.0
    %89 = vmatpush1.msra.mxu0 0.0
    %90 = vmatprep.subr.mxu0 0.0
    %91 = vmatpush1.msra.mxu0 0.0
    %92 = vmatprep.subr.mxu0 0.0
    %93 = vmatpush1.msra.mxu0 0.0
    %94 = vmatprep.subr.mxu0 0.0
    %95 = vmatpush1.msra.mxu0 0.0
    %96 = vmatprep.subr.mxu0 0.0
    %97 = vmatpush1.msra.mxu0 0.0
    %98 = vmatprep.subr.mxu0 0.0
    %99 = vmatpush1.msra.mxu0 0.0
    %100 = vmatprep.subr.mxu0 0.0
    %101 = vmatpush1.msra.mxu0 0.0
    %102 = vmatprep.subr.mxu0 0.0
    %103 = vmatpush1.msra.mxu0 %v62
    %104 = vmatprep.subr.mxu0 0.0
    %105 = vmatpush1.msra.mxu0 %v61
    %106 = vmatprep.subr.mxu0 0.0
    %107 = vmatpush2.msra.mxu0 0.0
    %108 = vmatprep.subr.mxu0 0.0
    %109 = vmatpush2.msra.mxu0 0.0
    %110 = vmatprep.subr.mxu0 0.0
    %111 = vmatpush2.msra.mxu0 0.0
    %112 = vmatprep.subr.mxu0 0.0
    %113 = vmatpush2.msra.mxu0 0.0
    %114 = vmatprep.subr.mxu0 0.0
    %115 = vmatpush2.msra.mxu0 0.0
    %116 = vmatprep.subr.mxu0 0.0
    %117 = vmatpush2.msra.mxu0 0.0
    %118 = vmatprep.subr.mxu0 0.0
    %119 = vmatpush2.msra.mxu0 0.0
    %120 = vmatprep.subr.mxu0 0.0
    %121 = vmatpush2.msra.mxu0 0.0
    %122 = vmatprep.subr.mxu0 0.0
    %123 = vmatpush2.msra.mxu0 0.0
    %124 = vmatprep.subr.mxu0 0.0
    %125 = vmatpush2.msra.mxu0 0.0
    %126 = vmatprep.subr.mxu0 0.0
    %127 = vmatpush2.msra.mxu0 0.0
    %128 = vmatprep.subr.mxu0 0.0
    %129 = vmatpush2.msra.mxu0 0.0
    %130 = vmatprep.subr.mxu0 0.0
    %131 = vmatpush2.msra.mxu0 0.0
    %132 = vmatprep.subr.mxu0 0.0
    %133 = vmatpush2.msra.mxu0 0.0
    %134 = vmatprep.subr.mxu0 0.0
    %135 = vmatpush2.msra.mxu0 0.0
    %136 = vmatprep.subr.mxu0 0.0
    %137 = vmatpush2.msra.mxu0 0.0
    %138 = vmatprep.mubr.f32.mxu0 0.0
    %139 = vmatmul.mubr.f32.gmra.mxu0 %v72
    %v140 = vpop.f32.mrf.mxu0
    %v141 = vadd.f32 %v68, %v140
    %v142 = vpop.f32.mrf.mxu0
    %143 = vdwg.mxu0
    %v144 = vadd.f32 %v141, 1.0
    %v145 = vmul.f32 %v144, 0.1
    %v146 = vsub.f32 %v145, 1.0
    %v147 = vsub.f32 %v141, 1.0
    %v148 = vmul.f32 %v147, 0.1
    %v149 = vadd.f32 %v148, 1.0
    %v150 = vmin.f32 %v149, %v141
    %v151 = vmax.f32 %v146, %v150
    %v152 = vld [vmem:[#allocation7] sm:$0xff]
    %v153 = vld [vmem:[#allocation7 + $0x8] sm:$0xff]
    %v154 = vld [vmem:[#allocation7 + $0x10] sm:$0xff]
    %v155 = vld [vmem:[#allocation7 + $0x18] sm:$0xff]
    %v156 = vld [vmem:[%s4] sm:$0x1]
    %v158 = vlaneseq
    %v159 = vshrl.u32 %v158, 7
    %v160 = vsub.s32 0, %v159
    %v161 = vrot.slane %v156, %v160
    %vm163 = vcmask 261120
    %v165 = vsel %vm163, %v151, 0
    %167 = vmatprep.subr.mxu0 0.0
    %168 = vmatpush1.msra.mxu0 0.0
    %169 = vmatprep.subr.mxu0 0.0
    %170 = vmatpush1.msra.mxu0 0.0
    %171 = vmatprep.subr.mxu0 0.0
    %172 = vmatpush1.msra.mxu0 0.0
    %173 = vmatprep.subr.mxu0 0.0
    %174 = vmatpush1.msra.mxu0 0.0
    %175 = vmatprep.subr.mxu0 0.0
    %176 = vmatpush1.msra.mxu0 0.0
    %177 = vmatprep.subr.mxu0 0.0
    %178 = vmatpush1.msra.mxu0 0.0
    %179 = vmatprep.subr.mxu0 0.0
    %180 = vmatpush1.msra.mxu0 0.0
    %181 = vmatprep.subr.mxu0 0.0
    %182 = vmatpush1.msra.mxu0 0.0
    %183 = vmatprep.subr.mxu0 0.0
    %184 = vmatpush1.msra.mxu0 0.0
    %185 = vmatprep.subr.mxu0 0.0
    %186 = vmatpush1.msra.mxu0 0.0
    %187 = vmatprep.subr.mxu0 0.0
    %188 = vmatpush1.msra.mxu0 0.0
    %189 = vmatprep.subr.mxu0 0.0
    %190 = vmatpush1.msra.mxu0 0.0
    %191 = vmatprep.subr.mxu0 0.0
    %192 = vmatpush1.msra.mxu0 %v155
    %193 = vmatprep.subr.mxu0 0.0
    %194 = vmatpush1.msra.mxu0 %v154
    %195 = vmatprep.subr.mxu0 0.0
    %196 = vmatpush1.msra.mxu0 %v153
    %197 = vmatprep.subr.mxu0 0.0
    %198 = vmatpush1.msra.mxu0 %v152
    %199 = vmatprep.subr.mxu0 0.0
    %200 = vmatpush2.msra.mxu0 0.0
    %201 = vmatprep.subr.mxu0 0.0
    %202 = vmatpush2.msra.mxu0 0.0
    %203 = vmatprep.subr.mxu0 0.0
    %204 = vmatpush2.msra.mxu0 0.0
    %205 = vmatprep.subr.mxu0 0.0
    %206 = vmatpush2.msra.mxu0 0.0
    %207 = vmatprep.subr.mxu0 0.0
    %208 = vmatpush2.msra.mxu0 0.0
    %209 = vmatprep.subr.mxu0 0.0
    %210 = vmatpush2.msra.mxu0 0.0
    %211 = vmatprep.subr.mxu0 0.0
    %212 = vmatpush2.msra.mxu0 0.0
    %213 = vmatprep.subr.mxu0 0.0
    %214 = vmatpush2.msra.mxu0 0.0
    %215 = vmatprep.subr.mxu0 0.0
    %216 = vmatpush2.msra.mxu0 0.0
    %217 = vmatprep.subr.mxu0 0.0
    %218 = vmatpush2.msra.mxu0 0.0
    %219 = vmatprep.subr.mxu0 0.0
    %220 = vmatpush2.msra.mxu0 0.0
    %221 = vmatprep.subr.mxu0 0.0
    %222 = vmatpush2.msra.mxu0 0.0
    %223 = vmatprep.subr.mxu0 0.0
    %224 = vmatpush2.msra.mxu0 0.0
    %225 = vmatprep.subr.mxu0 0.0
    %226 = vmatpush2.msra.mxu0 0.0
    %227 = vmatprep.subr.mxu0 0.0
    %228 = vmatpush2.msra.mxu0 0.0
    %229 = vmatprep.subr.mxu0 0.0
    %230 = vmatpush2.msra.mxu0 0.0
    %231 = vmatprep.mubr.f32.mxu0 0.0
    %232 = vmatmul.mubr.f32.gmra.mxu0 %v165
    %v233 = vpop.f32.mrf.mxu0
    %v234 = vadd.f32 %v161, %v233
    %v235 = vpop.f32.mrf.mxu0
    %236 = vdwg.mxu0
    %v237 = vadd.f32 %v234, 1.0
    %v238 = vmul.f32 %v237, 0.1
    %v239 = vsub.f32 %v238, 1.0
    %v240 = vsub.f32 %v234, 1.0
    %v241 = vmul.f32 %v240, 0.1
    %v242 = vadd.f32 %v241, 1.0
    %v243 = vmin.f32 %v242, %v234
    %v244 = vmax.f32 %v239, %v243
    %vm245 = vcmask 254976
    %246 = vst.msk [vmem:[#allocation8] sm:$0x3] %vm245, %v244
    // Predicated region
    $region34: #{tpu_custom_call.1} parent=1 // pred_check
      _
    $region35: #{tpu_custom_call.1} parent=1 // pred_check_branch
      %248 = sbr.rel (0) target = $region37
    $region36: #{tpu_custom_call.1} parent=1 // pred_region
      %s250 = ssub.s32 32, 32
      %251 = vsyncadd [#allocation4], %s250
      %s253 = sshll.u32 [#allocation8], 4
      %s254 = int_to_ptr.vmem [resolvable:$true] %s253
      %256 = dma.vmem_to_hbm [thread:$0]  %s254, 32, %s5, [#allocation4]
    $region37: #{tpu_custom_call.1} parent=1 // pred_fallthru
      _
    // Predicated region
    $region38: #{tpu_custom_call.1} parent=1 // pred_check
      _
    $region39: #{tpu_custom_call.1} parent=1 // pred_check_branch
      %258 = sbr.rel (0) target = $region41
    $region40: #{tpu_custom_call.1} parent=1 // pred_region
      %259 = dma.done [#allocation4], 32
    $region41: #{tpu_custom_call.1} parent=1 // pred_fallthru
      _
    %260 = vsyncpa [#allocation3], 1
    %261 = vsyncpa [#allocation6], 1
    %262 = vsyncpa [#allocation4], 1

</llo_original>
